<compile_context>
chip_gen: v5e
topology: v5e:2x2
jax: 0.10.0
libtpu: 0.0.40
codegen_flags: <defaults>
</compile_context>

<pallas_src>
import jax
import jax.numpy as jnp
from jax import lax
from jax.experimental import pallas as pl
from jax.experimental.pallas import tpu as pltpu

_M_PAD = 8  # pad Cout (=1) up to one sublane group for the MXU LHS


def _make_out_conv_kernel(N, H, W, Cin, Cout):
    HW = H * W
    NHW = N * HW

    def kernel(x_ref, w_ref, b_ref, o_ref, patches_ref):
        # x_ref:       (N, Cin, HW)      full batch, channels x flattened spatial
        # w_ref:       (_M_PAD, 9*Cin)   packed conv weights, row = (dy*3+dx)*Cin + c
        # b_ref:       (Cout,)           bias, in SMEM
        # o_ref:       (Cout, N*HW)      lane-dense output
        # patches_ref: (9*Cin, N*HW)     VMEM scratch for the im2col matrix

        # --- per-image boundary predicates, computed once at one sublane row ---
        col = lax.broadcasted_iota(jnp.int32, (1, HW), 1)
        if (W & (W - 1)) == 0:  # power-of-two width: bit ops (true here)
            h_idx = col >> (W.bit_length() - 1)
            w_idx = col & (W - 1)
        else:
            h_idx = col // W
            w_idx = col % W
        top = h_idx >= 1          # row above exists      (dy == 0)
        bottom = h_idx < (H - 1)  # row below exists      (dy == 2)
        left = w_idx >= 1         # column left exists    (dx == 0)
        right = w_idx < (W - 1)   # column right exists   (dx == 2)

        # Combined mask per tap (built once, reused for every image).
        masks = []
        for dy in range(3):
            for dx in range(3):
                row_m = top if dy == 0 else (bottom if dy == 2 else None)
                col_m = left if dx == 0 else (right if dx == 2 else None)
                if row_m is None:
                    m = col_m
                elif col_m is None:
                    m = row_m
                else:
                    m = row_m & col_m
                masks.append(m)  # None for the center tap

        # --- stream masked taps into the im2col scratch (bounded live set) ---
        for n in range(N):           # unrolled: N is small and static
            x = x_ref[n]             # (Cin, HW)
            for k in range(9):
                dy, dx = k // 3, k % 3
                s = (dy - 1) * W + (dx - 1)  # flat shift to (dy, dx) neighbor
                if s == 0:
                    t = x
                else:
                    # t[:, i] = x[:, (i + s) % HW]; wrapped lanes are masked below.
                    t = pltpu.roll(x, shift=(-s) % HW, axis=1)
                m = masks[k]
                if m is not None:
                    t = jnp.where(m, t, 0.0)  # (1, HW) mask broadcasts over Cin
                patches_ref[pl.ds(k * Cin, Cin), pl.ds(n * HW, HW)] = t

        # --- single MXU matmul over the whole batch ---
        acc = jnp.dot(w_ref[...], patches_ref[...],
                      preferred_element_type=jnp.float32)   # (_M_PAD, N*HW)
        out = jnp.tanh(acc[0:Cout] + b_ref[0])              # Cout == 1
        o_ref[...] = out.astype(o_ref.dtype)

    return kernel


def out_conv_block(x_nchw, weight_oihw, bias):
    """Forward of OutConvBlock: tanh(conv2d(x, w, b, stride=1, pad=1)).

    x_nchw:      (N, Cin, H, W)    float32
    weight_oihw: (Cout, Cin, 3, 3) float32 (PyTorch layout)
    bias:        (Cout,)           float32
    returns:     (N, Cout, H, W)   float32
    """
    N, Cin, H, W = x_nchw.shape
    Cout, Cin_w, KH, KW = weight_oihw.shape
    assert (Cin_w, KH, KW) == (Cin, 3, 3)
    assert Cout == 1, "OutConvBlock has out_channels=1"
    HW = H * W
    NHW = N * HW
    KKC = KH * KW * Cin

    # Free reshape: NCHW -> (N, Cin, H*W); flattened spatial is the lane dim.
    x_flat = x_nchw.reshape(N, Cin, HW)
    # OIHW -> (Cout, 9*Cin) with row ordering (dy, dx, c), zero-padded to 8 rows.
    w_row = jnp.transpose(weight_oihw, (0, 2, 3, 1)).reshape(Cout, KKC)
    w_packed = jnp.zeros((_M_PAD, KKC), dtype=x_nchw.dtype).at[:Cout].set(w_row)
    b = bias.reshape(Cout).astype(x_nchw.dtype)

    kernel = _make_out_conv_kernel(N, H, W, Cin, Cout)
    out_flat = pl.pallas_call(
        kernel,
        out_shape=jax.ShapeDtypeStruct((Cout, NHW), x_nchw.dtype),
        grid_spec=pltpu.PrefetchScalarGridSpec(
            num_scalar_prefetch=0,
            grid=(1,),  # whole batch in one step: one DMA per operand
            in_specs=[
                pl.BlockSpec((N, Cin, HW), lambda i: (0, 0, 0)),
                pl.BlockSpec((_M_PAD, KKC), lambda i: (0, 0)),
                pl.BlockSpec(memory_space=pltpu.MemorySpace.SMEM),
            ],
            out_specs=pl.BlockSpec((Cout, NHW), lambda i: (0, 0)),
            scratch_shapes=[pltpu.VMEM((9 * Cin, NHW), jnp.float32)],
        ),
        compiler_params=pltpu.CompilerParams(
            dimension_semantics=("arbitrary",)),
    )(x_flat, w_packed, b)

    # Cout == 1, so (Cout, N*HW) -> (N, Cout, H, W) is a pure reshape.
    return out_flat.reshape(N, Cout, H, W)


def _reference(x_nchw, weight_oihw, bias):
    y = lax.conv_general_dilated(
        x_nchw, weight_oihw,
        window_strides=(1, 1), padding=((1, 1), (1, 1)),
        dimension_numbers=("NCHW", "OIHW", "NCHW"))
    return jnp.tanh(y + bias.reshape(1, -1, 1, 1))


if __name__ == "__main__":
    key = jax.random.PRNGKey(0)
    k_x, k_w, k_b = jax.random.split(key, 3)

    N, Cin, H, W = 2, 16, 16, 16
    Cout, K = 1, 3

    x = jax.random.normal(k_x, (N, Cin, H, W), dtype=jnp.float32)
    # Deterministic "Kaiming-ish" init consistent with nn.Conv2d shapes.
    fan_in = Cin * K * K
    bound = 1.0 / (fan_in ** 0.5)
    weight = jax.random.uniform(k_w, (Cout, Cin, K, K),
                                minval=-bound, maxval=bound,
                                dtype=jnp.float32)
    bias = jax.random.uniform(k_b, (Cout,), minval=-bound, maxval=bound,
                              dtype=jnp.float32)

    out = out_conv_block(x, weight, bias)
    out = jax.block_until_ready(out)

    ref = jax.block_until_ready(_reference(x, weight, bias))
    assert out.shape == (N, Cout, H, W)
    assert jnp.allclose(out, ref, atol=1e-4, rtol=1e-4), (
        float(jnp.max(jnp.abs(out - ref))))

    print("KERNEL_OK")
</pallas_src>

<mosaic_0001>
module attributes {stable_mosaic.version = 11 : i64} {
  func.func @kernel(%arg0: i32, %arg1: memref<2x16x256xf32, #tpu.memory_space<vmem>>, %arg2: memref<8x144xf32, #tpu.memory_space<vmem>>, %arg3: memref<1xf32, #tpu.memory_space<smem>>, %arg4: memref<1x512xf32, #tpu.memory_space<vmem>>, %arg5: memref<144x512xf32, #tpu.memory_space<vmem>>) attributes {dimension_semantics = [#tpu.dimension_semantics<arbitrary>], iteration_bounds = array<i64: 1>, scalar_prefetch = 0 : i64, scratch_operands = 1 : i64, tpu.core_type = #tpu.core_type<tc>, window_params = [{pipeline_mode = #tpu.pipeline_mode<synchronous>, transform_indices = @transform_0, window_bounds = array<i64: 2, 16, 256>}, {pipeline_mode = #tpu.pipeline_mode<synchronous>, transform_indices = @transform_1, window_bounds = array<i64: 8, 144>}, {transform_indices = @transform_2, window_bounds = array<i64: 1>}, {pipeline_mode = #tpu.pipeline_mode<synchronous>, transform_indices = @transform_3, window_bounds = array<i64: 1, 512>}]} {
    %0 = tpu.iota {dimensions = array<i32: 1>} : vector<1x256xi32>
    %c4_i32 = arith.constant 4 : i32
    %1 = vector.broadcast %c4_i32 : i32 to vector<1x256xi32>
    %2 = arith.shrsi %0, %1 : vector<1x256xi32>
    %c15_i32 = arith.constant 15 : i32
    %3 = vector.broadcast %c15_i32 : i32 to vector<1x256xi32>
    %4 = arith.andi %0, %3 : vector<1x256xi32>
    %c1_i32 = arith.constant 1 : i32
    %5 = vector.broadcast %c1_i32 : i32 to vector<1x256xi32>
    %6 = arith.cmpi sge, %2, %5 : vector<1x256xi32>
    %c15_i32_0 = arith.constant 15 : i32
    %7 = vector.broadcast %c15_i32_0 : i32 to vector<1x256xi32>
    %8 = arith.cmpi slt, %2, %7 : vector<1x256xi32>
    %c1_i32_1 = arith.constant 1 : i32
    %9 = vector.broadcast %c1_i32_1 : i32 to vector<1x256xi32>
    %10 = arith.cmpi sge, %4, %9 : vector<1x256xi32>
    %c15_i32_2 = arith.constant 15 : i32
    %11 = vector.broadcast %c15_i32_2 : i32 to vector<1x256xi32>
    %12 = arith.cmpi slt, %4, %11 : vector<1x256xi32>
    %13 = arith.andi %6, %10 : vector<1x256xi1>
    %14 = arith.andi %6, %12 : vector<1x256xi1>
    %15 = arith.andi %8, %10 : vector<1x256xi1>
    %16 = arith.andi %8, %12 : vector<1x256xi1>
    %c0 = arith.constant 0 : index
    %c0_3 = arith.constant 0 : index
    %c0_4 = arith.constant 0 : index
    %17 = vector.load %arg1[%c0, %c0_3, %c0_4] : memref<2x16x256xf32, #tpu.memory_space<vmem>>, vector<1x16x256xf32>
    %18 = vector.shape_cast %17 : vector<1x16x256xf32> to vector<16x256xf32>
    %c17_i32 = arith.constant 17 : i32
    %19 = tpu.dynamic_rotate %18 by %c17_i32 dim 1 : vector<16x256xf32>, i32 -> vector<16x256xf32>
    %cst = arith.constant 0.000000e+00 : f32
    %20 = vector.shape_cast %13 : vector<1x256xi1> to vector<1x256xi1>
    %21 = vector.broadcast %20 : vector<1x256xi1> to vector<16x256xi1>
    %22 = vector.broadcast %cst : f32 to vector<16x256xf32>
    %23 = arith.select %21, %19, %22 : vector<16x256xi1>, vector<16x256xf32>
    %c0_5 = arith.constant 0 : index
    %c0_6 = arith.constant 0 : index
    %24 = vector.load %arg5[%c0_5, %c0_6] : memref<144x512xf32, #tpu.memory_space<vmem>>, vector<16x256xf32>
    tpu.vector_store %arg5[%c0_5, %c0_6], %23 {strides = array<i32>} : memref<144x512xf32, #tpu.memory_space<vmem>>, vector<16x256xf32>,
    %c16_i32 = arith.constant 16 : i32
    %25 = tpu.dynamic_rotate %18 by %c16_i32 dim 1 : vector<16x256xf32>, i32 -> vector<16x256xf32>
    %cst_7 = arith.constant 0.000000e+00 : f32
    %26 = vector.shape_cast %6 : vector<1x256xi1> to vector<1x256xi1>
    %27 = vector.broadcast %26 : vector<1x256xi1> to vector<16x256xi1>
    %28 = vector.broadcast %cst_7 : f32 to vector<16x256xf32>
    %29 = arith.select %27, %25, %28 : vector<16x256xi1>, vector<16x256xf32>
    %c16 = arith.constant 16 : index
    %c0_8 = arith.constant 0 : index
    %30 = vector.load %arg5[%c16, %c0_8] : memref<144x512xf32, #tpu.memory_space<vmem>>, vector<16x256xf32>
    tpu.vector_store %arg5[%c16, %c0_8], %29 {strides = array<i32>} : memref<144x512xf32, #tpu.memory_space<vmem>>, vector<16x256xf32>,
    %c15_i32_9 = arith.constant 15 : i32
    %31 = tpu.dynamic_rotate %18 by %c15_i32_9 dim 1 : vector<16x256xf32>, i32 -> vector<16x256xf32>
    %cst_10 = arith.constant 0.000000e+00 : f32
    %32 = vector.shape_cast %14 : vector<1x256xi1> to vector<1x256xi1>
    %33 = vector.broadcast %32 : vector<1x256xi1> to vector<16x256xi1>
    %34 = vector.broadcast %cst_10 : f32 to vector<16x256xf32>
    %35 = arith.select %33, %31, %34 : vector<16x256xi1>, vector<16x256xf32>
    %c32 = arith.constant 32 : index
    %c0_11 = arith.constant 0 : index
    %36 = vector.load %arg5[%c32, %c0_11] : memref<144x512xf32, #tpu.memory_space<vmem>>, vector<16x256xf32>
    tpu.vector_store %arg5[%c32, %c0_11], %35 {strides = array<i32>} : memref<144x512xf32, #tpu.memory_space<vmem>>, vector<16x256xf32>,
    %c1_i32_12 = arith.constant 1 : i32
    %37 = tpu.dynamic_rotate %18 by %c1_i32_12 dim 1 : vector<16x256xf32>, i32 -> vector<16x256xf32>
    %cst_13 = arith.constant 0.000000e+00 : f32
    %38 = vector.shape_cast %10 : vector<1x256xi1> to vector<1x256xi1>
    %39 = vector.broadcast %38 : vector<1x256xi1> to vector<16x256xi1>
    %40 = vector.broadcast %cst_13 : f32 to vector<16x256xf32>
    %41 = arith.select %39, %37, %40 : vector<16x256xi1>, vector<16x256xf32>
    %c48 = arith.constant 48 : index
    %c0_14 = arith.constant 0 : index
    %42 = vector.load %arg5[%c48, %c0_14] : memref<144x512xf32, #tpu.memory_space<vmem>>, vector<16x256xf32>
    tpu.vector_store %arg5[%c48, %c0_14], %41 {strides = array<i32>} : memref<144x512xf32, #tpu.memory_space<vmem>>, vector<16x256xf32>,
    %c64 = arith.constant 64 : index
    %c0_15 = arith.constant 0 : index
    %43 = vector.load %arg5[%c64, %c0_15] : memref<144x512xf32, #tpu.memory_space<vmem>>, vector<16x256xf32>
    tpu.vector_store %arg5[%c64, %c0_15], %18 {strides = array<i32>} : memref<144x512xf32, #tpu.memory_space<vmem>>, vector<16x256xf32>,
    %c255_i32 = arith.constant 255 : i32
    %44 = tpu.dynamic_rotate %18 by %c255_i32 dim 1 : vector<16x256xf32>, i32 -> vector<16x256xf32>
    %cst_16 = arith.constant 0.000000e+00 : f32
    %45 = vector.shape_cast %12 : vector<1x256xi1> to vector<1x256xi1>
    %46 = vector.broadcast %45 : vector<1x256xi1> to vector<16x256xi1>
    %47 = vector.broadcast %cst_16 : f32 to vector<16x256xf32>
    %48 = arith.select %46, %44, %47 : vector<16x256xi1>, vector<16x256xf32>
    %c80 = arith.constant 80 : index
    %c0_17 = arith.constant 0 : index
    %49 = vector.load %arg5[%c80, %c0_17] : memref<144x512xf32, #tpu.memory_space<vmem>>, vector<16x256xf32>
    tpu.vector_store %arg5[%c80, %c0_17], %48 {strides = array<i32>} : memref<144x512xf32, #tpu.memory_space<vmem>>, vector<16x256xf32>,
    %c241_i32 = arith.constant 241 : i32
    %50 = tpu.dynamic_rotate %18 by %c241_i32 dim 1 : vector<16x256xf32>, i32 -> vector<16x256xf32>
    %cst_18 = arith.constant 0.000000e+00 : f32
    %51 = vector.shape_cast %15 : vector<1x256xi1> to vector<1x256xi1>
    %52 = vector.broadcast %51 : vector<1x256xi1> to vector<16x256xi1>
    %53 = vector.broadcast %cst_18 : f32 to vector<16x256xf32>
    %54 = arith.select %52, %50, %53 : vector<16x256xi1>, vector<16x256xf32>
    %c96 = arith.constant 96 : index
    %c0_19 = arith.constant 0 : index
    %55 = vector.load %arg5[%c96, %c0_19] : memref<144x512xf32, #tpu.memory_space<vmem>>, vector<16x256xf32>
    tpu.vector_store %arg5[%c96, %c0_19], %54 {strides = array<i32>} : memref<144x512xf32, #tpu.memory_space<vmem>>, vector<16x256xf32>,
    %c240_i32 = arith.constant 240 : i32
    %56 = tpu.dynamic_rotate %18 by %c240_i32 dim 1 : vector<16x256xf32>, i32 -> vector<16x256xf32>
    %cst_20 = arith.constant 0.000000e+00 : f32
    %57 = vector.shape_cast %8 : vector<1x256xi1> to vector<1x256xi1>
    %58 = vector.broadcast %57 : vector<1x256xi1> to vector<16x256xi1>
    %59 = vector.broadcast %cst_20 : f32 to vector<16x256xf32>
    %60 = arith.select %58, %56, %59 : vector<16x256xi1>, vector<16x256xf32>
    %c112 = arith.constant 112 : index
    %c0_21 = arith.constant 0 : index
    %61 = vector.load %arg5[%c112, %c0_21] : memref<144x512xf32, #tpu.memory_space<vmem>>, vector<16x256xf32>
    tpu.vector_store %arg5[%c112, %c0_21], %60 {strides = array<i32>} : memref<144x512xf32, #tpu.memory_space<vmem>>, vector<16x256xf32>,
    %c239_i32 = arith.constant 239 : i32
    %62 = tpu.dynamic_rotate %18 by %c239_i32 dim 1 : vector<16x256xf32>, i32 -> vector<16x256xf32>
    %cst_22 = arith.constant 0.000000e+00 : f32
    %63 = vector.shape_cast %16 : vector<1x256xi1> to vector<1x256xi1>
    %64 = vector.broadcast %63 : vector<1x256xi1> to vector<16x256xi1>
    %65 = vector.broadcast %cst_22 : f32 to vector<16x256xf32>
    %66 = arith.select %64, %62, %65 : vector<16x256xi1>, vector<16x256xf32>
    %c128 = arith.constant 128 : index
    %c0_23 = arith.constant 0 : index
    %67 = vector.load %arg5[%c128, %c0_23] : memref<144x512xf32, #tpu.memory_space<vmem>>, vector<16x256xf32>
    tpu.vector_store %arg5[%c128, %c0_23], %66 {strides = array<i32>} : memref<144x512xf32, #tpu.memory_space<vmem>>, vector<16x256xf32>,
    %c1 = arith.constant 1 : index
    %c0_24 = arith.constant 0 : index
    %c0_25 = arith.constant 0 : index
    %68 = vector.load %arg1[%c1, %c0_24, %c0_25] : memref<2x16x256xf32, #tpu.memory_space<vmem>>, vector<1x16x256xf32>
    %69 = vector.shape_cast %68 : vector<1x16x256xf32> to vector<16x256xf32>
    %c17_i32_26 = arith.constant 17 : i32
    %70 = tpu.dynamic_rotate %69 by %c17_i32_26 dim 1 : vector<16x256xf32>, i32 -> vector<16x256xf32>
    %cst_27 = arith.constant 0.000000e+00 : f32
    %71 = vector.shape_cast %13 : vector<1x256xi1> to vector<1x256xi1>
    %72 = vector.broadcast %71 : vector<1x256xi1> to vector<16x256xi1>
    %73 = vector.broadcast %cst_27 : f32 to vector<16x256xf32>
    %74 = arith.select %72, %70, %73 : vector<16x256xi1>, vector<16x256xf32>
    %c0_28 = arith.constant 0 : index
    %c256 = arith.constant 256 : index
    %75 = vector.load %arg5[%c0_28, %c256] : memref<144x512xf32, #tpu.memory_space<vmem>>, vector<16x256xf32>
    tpu.vector_store %arg5[%c0_28, %c256], %74 {strides = array<i32>} : memref<144x512xf32, #tpu.memory_space<vmem>>, vector<16x256xf32>,
    %c16_i32_29 = arith.constant 16 : i32
    %76 = tpu.dynamic_rotate %69 by %c16_i32_29 dim 1 : vector<16x256xf32>, i32 -> vector<16x256xf32>
    %cst_30 = arith.constant 0.000000e+00 : f32
    %77 = vector.shape_cast %6 : vector<1x256xi1> to vector<1x256xi1>
    %78 = vector.broadcast %77 : vector<1x256xi1> to vector<16x256xi1>
    %79 = vector.broadcast %cst_30 : f32 to vector<16x256xf32>
    %80 = arith.select %78, %76, %79 : vector<16x256xi1>, vector<16x256xf32>
    %c16_31 = arith.constant 16 : index
    %c256_32 = arith.constant 256 : index
    %81 = vector.load %arg5[%c16_31, %c256_32] : memref<144x512xf32, #tpu.memory_space<vmem>>, vector<16x256xf32>
    tpu.vector_store %arg5[%c16_31, %c256_32], %80 {strides = array<i32>} : memref<144x512xf32, #tpu.memory_space<vmem>>, vector<16x256xf32>,
    %c15_i32_33 = arith.constant 15 : i32
    %82 = tpu.dynamic_rotate %69 by %c15_i32_33 dim 1 : vector<16x256xf32>, i32 -> vector<16x256xf32>
    %cst_34 = arith.constant 0.000000e+00 : f32
    %83 = vector.shape_cast %14 : vector<1x256xi1> to vector<1x256xi1>
    %84 = vector.broadcast %83 : vector<1x256xi1> to vector<16x256xi1>
    %85 = vector.broadcast %cst_34 : f32 to vector<16x256xf32>
    %86 = arith.select %84, %82, %85 : vector<16x256xi1>, vector<16x256xf32>
    %c32_35 = arith.constant 32 : index
    %c256_36 = arith.constant 256 : index
    %87 = vector.load %arg5[%c32_35, %c256_36] : memref<144x512xf32, #tpu.memory_space<vmem>>, vector<16x256xf32>
    tpu.vector_store %arg5[%c32_35, %c256_36], %86 {strides = array<i32>} : memref<144x512xf32, #tpu.memory_space<vmem>>, vector<16x256xf32>,
    %c1_i32_37 = arith.constant 1 : i32
    %88 = tpu.dynamic_rotate %69 by %c1_i32_37 dim 1 : vector<16x256xf32>, i32 -> vector<16x256xf32>
    %cst_38 = arith.constant 0.000000e+00 : f32
    %89 = vector.shape_cast %10 : vector<1x256xi1> to vector<1x256xi1>
    %90 = vector.broadcast %89 : vector<1x256xi1> to vector<16x256xi1>
    %91 = vector.broadcast %cst_38 : f32 to vector<16x256xf32>
    %92 = arith.select %90, %88, %91 : vector<16x256xi1>, vector<16x256xf32>
    %c48_39 = arith.constant 48 : index
    %c256_40 = arith.constant 256 : index
    %93 = vector.load %arg5[%c48_39, %c256_40] : memref<144x512xf32, #tpu.memory_space<vmem>>, vector<16x256xf32>
    tpu.vector_store %arg5[%c48_39, %c256_40], %92 {strides = array<i32>} : memref<144x512xf32, #tpu.memory_space<vmem>>, vector<16x256xf32>,
    %c64_41 = arith.constant 64 : index
    %c256_42 = arith.constant 256 : index
    %94 = vector.load %arg5[%c64_41, %c256_42] : memref<144x512xf32, #tpu.memory_space<vmem>>, vector<16x256xf32>
    tpu.vector_store %arg5[%c64_41, %c256_42], %69 {strides = array<i32>} : memref<144x512xf32, #tpu.memory_space<vmem>>, vector<16x256xf32>,
    %c255_i32_43 = arith.constant 255 : i32
    %95 = tpu.dynamic_rotate %69 by %c255_i32_43 dim 1 : vector<16x256xf32>, i32 -> vector<16x256xf32>
    %cst_44 = arith.constant 0.000000e+00 : f32
    %96 = vector.shape_cast %12 : vector<1x256xi1> to vector<1x256xi1>
    %97 = vector.broadcast %96 : vector<1x256xi1> to vector<16x256xi1>
    %98 = vector.broadcast %cst_44 : f32 to vector<16x256xf32>
    %99 = arith.select %97, %95, %98 : vector<16x256xi1>, vector<16x256xf32>
    %c80_45 = arith.constant 80 : index
    %c256_46 = arith.constant 256 : index
    %100 = vector.load %arg5[%c80_45, %c256_46] : memref<144x512xf32, #tpu.memory_space<vmem>>, vector<16x256xf32>
    tpu.vector_store %arg5[%c80_45, %c256_46], %99 {strides = array<i32>} : memref<144x512xf32, #tpu.memory_space<vmem>>, vector<16x256xf32>,
    %c241_i32_47 = arith.constant 241 : i32
    %101 = tpu.dynamic_rotate %69 by %c241_i32_47 dim 1 : vector<16x256xf32>, i32 -> vector<16x256xf32>
    %cst_48 = arith.constant 0.000000e+00 : f32
    %102 = vector.shape_cast %15 : vector<1x256xi1> to vector<1x256xi1>
    %103 = vector.broadcast %102 : vector<1x256xi1> to vector<16x256xi1>
    %104 = vector.broadcast %cst_48 : f32 to vector<16x256xf32>
    %105 = arith.select %103, %101, %104 : vector<16x256xi1>, vector<16x256xf32>
    %c96_49 = arith.constant 96 : index
    %c256_50 = arith.constant 256 : index
    %106 = vector.load %arg5[%c96_49, %c256_50] : memref<144x512xf32, #tpu.memory_space<vmem>>, vector<16x256xf32>
    tpu.vector_store %arg5[%c96_49, %c256_50], %105 {strides = array<i32>} : memref<144x512xf32, #tpu.memory_space<vmem>>, vector<16x256xf32>,
    %c240_i32_51 = arith.constant 240 : i32
    %107 = tpu.dynamic_rotate %69 by %c240_i32_51 dim 1 : vector<16x256xf32>, i32 -> vector<16x256xf32>
    %cst_52 = arith.constant 0.000000e+00 : f32
    %108 = vector.shape_cast %8 : vector<1x256xi1> to vector<1x256xi1>
    %109 = vector.broadcast %108 : vector<1x256xi1> to vector<16x256xi1>
    %110 = vector.broadcast %cst_52 : f32 to vector<16x256xf32>
    %111 = arith.select %109, %107, %110 : vector<16x256xi1>, vector<16x256xf32>
    %c112_53 = arith.constant 112 : index
    %c256_54 = arith.constant 256 : index
    %112 = vector.load %arg5[%c112_53, %c256_54] : memref<144x512xf32, #tpu.memory_space<vmem>>, vector<16x256xf32>
    tpu.vector_store %arg5[%c112_53, %c256_54], %111 {strides = array<i32>} : memref<144x512xf32, #tpu.memory_space<vmem>>, vector<16x256xf32>,
    %c239_i32_55 = arith.constant 239 : i32
    %113 = tpu.dynamic_rotate %69 by %c239_i32_55 dim 1 : vector<16x256xf32>, i32 -> vector<16x256xf32>
    %cst_56 = arith.constant 0.000000e+00 : f32
    %114 = vector.shape_cast %16 : vector<1x256xi1> to vector<1x256xi1>
    %115 = vector.broadcast %114 : vector<1x256xi1> to vector<16x256xi1>
    %116 = vector.broadcast %cst_56 : f32 to vector<16x256xf32>
    %117 = arith.select %115, %113, %116 : vector<16x256xi1>, vector<16x256xf32>
    %c128_57 = arith.constant 128 : index
    %c256_58 = arith.constant 256 : index
    %118 = vector.load %arg5[%c128_57, %c256_58] : memref<144x512xf32, #tpu.memory_space<vmem>>, vector<16x256xf32>
    tpu.vector_store %arg5[%c128_57, %c256_58], %117 {strides = array<i32>} : memref<144x512xf32, #tpu.memory_space<vmem>>, vector<16x256xf32>,
    %c0_59 = arith.constant 0 : index
    %c0_60 = arith.constant 0 : index
    %119 = vector.load %arg2[%c0_59, %c0_60] : memref<8x144xf32, #tpu.memory_space<vmem>>, vector<8x144xf32>
    %c0_61 = arith.constant 0 : index
    %c0_62 = arith.constant 0 : index
    %120 = vector.load %arg5[%c0_61, %c0_62] : memref<144x512xf32, #tpu.memory_space<vmem>>, vector<144x512xf32>
    %cst_63 = arith.constant dense<0.000000e+00> : vector<8x512xf32>
    %121 = tpu.matmul %119, %120, %cst_63 {dimension_numbers = #tpu.dot_dimension_numbers<[1], [0], [0], [1], [0, 0, 1, 1], [], []>} : vector<8x144xf32>, vector<144x512xf32>, vector<8x512xf32> -> vector<8x512xf32>
    %122 = vector.extract_strided_slice %121 {offsets = [0, 0], sizes = [1, 512], strides = [1, 1]} : vector<8x512xf32> to vector<1x512xf32>
    %c0_64 = arith.constant 0 : index
    %123 = memref.load %arg3[%c0_64] : memref<1xf32, #tpu.memory_space<smem>>
    %124 = vector.broadcast %123 : f32 to vector<1x512xf32>
    %125 = arith.addf %122, %124 : vector<1x512xf32>
    %126 = math.tanh %125 : vector<1x512xf32>
    %c0_65 = arith.constant 0 : index
    %c0_66 = arith.constant 0 : index
    %127 = vector.load %arg4[%c0_65, %c0_66] : memref<1x512xf32, #tpu.memory_space<vmem>>, vector<1x512xf32>
    tpu.vector_store %arg4[%c0_65, %c0_66], %126 {strides = array<i32>} : memref<1x512xf32, #tpu.memory_space<vmem>>, vector<1x512xf32>,
    return
  }
  func.func @transform_0(%arg0: i32) -> (i32, i32, i32) {
    %c0_i32 = arith.constant 0 : i32
    %c0_i32_0 = arith.constant 0 : i32
    %c0_i32_1 = arith.constant 0 : i32
    %c0_i32_2 = arith.constant 0 : i32
    return %c0_i32, %c0_i32_0, %c0_i32_1 : i32, i32, i32
  }
  func.func @transform_1(%arg0: i32) -> (i32, i32) {
    %c0_i32 = arith.constant 0 : i32
    %c0_i32_0 = arith.constant 0 : i32
    %c0_i32_1 = arith.constant 0 : i32
    return %c0_i32, %c0_i32_0 : i32, i32
  }
  func.func @transform_2(%arg0: i32) -> i32 {
    %c0_i32 = arith.constant 0 : i32
    %c0_i32_0 = arith.constant 0 : i32
    return %c0_i32 : i32
  }
  func.func @transform_3(%arg0: i32) -> (i32, i32) {
    %c0_i32 = arith.constant 0 : i32
    %c0_i32_0 = arith.constant 0 : i32
    %c0_i32_1 = arith.constant 0 : i32
    return %c0_i32, %c0_i32_0 : i32, i32
  }
}

</mosaic_0001>

<llo_original>
// kernel: tpu_custom_call.1
$region0: #{tpu_custom_call.1}
  #allocation0 [shape = 'u32[]', space=smem, size = 0x4, offset = 0x4, fixed_abs, tag = 'smem constant byte address 0x4 - core index']
  #allocation1 [shape = 'u32[72,128]{1,0:T(1,128)}', space=vmem, size = 0x9000, scoped, tag = 'internal scratch']
  #allocation2 [shape = 'f32[144,512]{1,0:T(8,128)}', space=vmem, size = 0x48000, scoped, tag = 'scratch operand']
  #allocation3 [shape = 'f32[1]{0:T(128)S(6)}', space=smem, size = 0x200, scoped, tag = 'scoped memory for tpu_custom_call.1']
  %s0 = inlined_call_operand.hbm [shape: f32[2,16,256], index: 0, kind: input, shape index: {}]
  %s1 = inlined_call_operand.hbm [shape: f32[8,144], index: 1, kind: input, shape index: {}]
  %s2 = inlined_call_operand.<no memory space> [shape: f32[1], index: 2, kind: input, shape index: {}]
  %s3 = inlined_call_operand.hbm [shape: f32[1,512], index: 3, kind: output, shape index: {}]
  %s4 = sld [smem:[#allocation0]]
  $region30: #{tpu_custom_call.1} parent=0
    _
  %s6 = ssub.s32 1, %s4
  %s7 = scalar_select 0, %s6, %s4
  %8 = sst [smem:[#allocation3]] %s2
  $region1: #{tpu_custom_call.1} parent=0
    #allocation4 [shape = 'u8[32768]{0}', space=vmem, size = 0x8000, scoped, tag = 'input window, operand 0, single buffered']
    #allocation5 [shape = 's32[1]{0}', space=sflag, size = 0x4, scoped, tag = 'scoped memory for tpu_custom_call.1']
    #allocation6 [shape = 's32[1]{0}', space=sflag, size = 0x4, scoped, tag = 'scoped memory for tpu_custom_call.1']
    #allocation7 [shape = 'u8[8192]{0}', space=vmem, size = 0x2000, scoped, tag = 'input window, operand 1, single buffered']
    #allocation8 [shape = 's32[1]{0}', space=sflag, size = 0x4, scoped, tag = 'scoped memory for tpu_custom_call.1']
    #allocation9 [shape = 'u8[2048]{0}', space=vmem, size = 0x800, scoped, tag = 'output window, operand 0, single buffered']
    %9 = vsyncpa [#allocation5], 0
    %10 = vsyncpa [#allocation8], 0
    %11 = vsyncpa [#allocation6], 0
    // Predicated region
    $region2: #{tpu_custom_call.1} parent=1 // pred_check
      _
    $region3: #{tpu_custom_call.1} parent=1 // pred_check_branch
      %13 = sbr.rel (0) target = $region5
    $region4: #{tpu_custom_call.1} parent=1 // pred_region
      %15 = vsyncadd [#allocation5], 0
      %s16 = sshll.u32 %s0, 4
      %s17 = int_to_ptr.hbm [resolvable:$true] %s16
      %s18 = sshll.u32 [#allocation4], 4
      %s19 = int_to_ptr.vmem [resolvable:$true] %s18
      %24 = dma.hbm_to_vmem [thread:$0]  %s17, 1024, %s19, [#allocation5], 256, 256, 16
    $region5: #{tpu_custom_call.1} parent=1 // pred_fallthru
      _
    // Predicated region
    $region6: #{tpu_custom_call.1} parent=1 // pred_check
      _
    $region7: #{tpu_custom_call.1} parent=1 // pred_check_branch
      %26 = sbr.rel (0) target = $region9
    $region8: #{tpu_custom_call.1} parent=1 // pred_region
      %28 = vsyncadd [#allocation8], 0
      %s30 = sshll.u32 %s1, 4
      %s31 = int_to_ptr.hbm [resolvable:$true] %s30
      %s32 = sshll.u32 [#allocation7], 4
      %s33 = int_to_ptr.vmem [resolvable:$true] %s32
      %35 = dma.hbm_to_vmem [thread:$0]  %s31, 256, %s33, [#allocation8]
    $region9: #{tpu_custom_call.1} parent=1 // pred_fallthru
      _
    // Predicated region
    $region10: #{tpu_custom_call.1} parent=1 // pred_check
      _
    $region11: #{tpu_custom_call.1} parent=1 // pred_check_branch
      %37 = sbr.rel (0) target = $region13
    $region12: #{tpu_custom_call.1} parent=1 // pred_region
      _
    $region13: #{tpu_custom_call.1} parent=1 // pred_fallthru
      _
    // Predicated region
    $region14: #{tpu_custom_call.1} parent=1 // pred_check
      _
    $region15: #{tpu_custom_call.1} parent=1 // pred_check_branch
      %39 = sbr.rel (0) target = $region17
    $region16: #{tpu_custom_call.1} parent=1 // pred_region
      %41 = dma.done [#allocation5], 1024
    $region17: #{tpu_custom_call.1} parent=1 // pred_fallthru
      _
    // Predicated region
    $region18: #{tpu_custom_call.1} parent=1 // pred_check
      _
    $region19: #{tpu_custom_call.1} parent=1 // pred_check_branch
      %43 = sbr.rel (0) target = $region21
    $region20: #{tpu_custom_call.1} parent=1 // pred_region
      %45 = dma.done [#allocation8], 256
    $region21: #{tpu_custom_call.1} parent=1 // pred_fallthru
      _
    %v46 = vlaneseq
    %v47 = vand.u32 %v46, 127
    %v48 = vadd.s32 %v47, 128
    %v49 = vshra.s32 %v47, 4
    %v50 = vshra.s32 %v48, 4
    %v51 = vand.u32 %v47, 15
    %v52 = vand.u32 %v48, 15
    %vm53 = vcmp.ge.s32.totalorder %v49, 1
    %vm54 = vcmp.ge.s32.totalorder %v50, 1
    %vm55 = vcmp.lt.s32.totalorder %v49, 15
    %vm56 = vcmp.lt.s32.totalorder %v50, 15
    %vm57 = vcmp.ge.s32.totalorder %v51, 1
    %vm58 = vcmp.ge.s32.totalorder %v52, 1
    %vm59 = vcmp.lt.s32.totalorder %v51, 15
    %vm60 = vcmp.lt.s32.totalorder %v52, 15
    %vm61 = vmand %vm53, %vm57
    %vm62 = vmand %vm54, %vm58
    %vm63 = vmand %vm53, %vm59
    %vm64 = vmand %vm54, %vm60
    %vm65 = vmand %vm55, %vm57
    %vm66 = vmand %vm56, %vm58
    %vm67 = vmand %vm55, %vm59
    %vm68 = vmand %vm56, %vm60
    %v69 = vld [vmem:[#allocation4] sm:$0xff]
    %v70 = vld [vmem:[#allocation4 + $0x8] sm:$0xff]
    %v71 = vld [vmem:[#allocation4 + $0x10] sm:$0xff]
    %v72 = vld [vmem:[#allocation4 + $0x18] sm:$0xff]
    %73 = vrot.lane.b32.xlu0 %v69, 17
    %v74 = vpop.permute.xlu0 %73
    %75 = vrot.lane.b32.xlu0 %v71, 17
    %v76 = vpop.permute.xlu0 %75
    %77 = vrot.lane.b32.xlu0 %v70, 17
    %v78 = vpop.permute.xlu0 %77
    %79 = vrot.lane.b32.xlu0 %v72, 17
    %v80 = vpop.permute.xlu0 %79
    %vm81 = vcmp.lt.s32.totalorder %v47, 17
    %v82 = vsel %vm81, %v74, %v78
    %v83 = vsel %vm81, %v76, %v80
    %v84 = vsel %vm81, %v78, %v74
    %v85 = vsel %vm81, %v80, %v76
    %v86 = vsel %vm61, 1, 0
    %v87 = vsel %vm62, 1, 0
    %vm88 = vcmp.eq.s32.totalorder %v86, 1
    %vm89 = vcmp.eq.s32.totalorder %v87, 1
    %v90 = vsel %vm88, %v84, 0.0
    %v91 = vsel %vm89, %v82, 0.0
    %v92 = vsel %vm88, %v85, 0.0
    %v93 = vsel %vm89, %v83, 0.0
    %94 = vst [vmem:[#allocation2] sm:$0xff] %v90
    %95 = vst [vmem:[#allocation2 + $0x8] sm:$0xff] %v91
    %96 = vst [vmem:[#allocation2 + $0x20] sm:$0xff] %v92
    %97 = vst [vmem:[#allocation2 + $0x28] sm:$0xff] %v93
    %98 = vrot.lane.b32.xlu0 %v69, 16
    %v99 = vpop.permute.xlu0 %98
    %100 = vrot.lane.b32.xlu0 %v71, 16
    %v101 = vpop.permute.xlu0 %100
    %102 = vrot.lane.b32.xlu0 %v70, 16
    %v103 = vpop.permute.xlu0 %102
    %104 = vrot.lane.b32.xlu0 %v72, 16
    %v105 = vpop.permute.xlu0 %104
    %vm106 = vcmp.lt.s32.totalorder %v47, 16
    %v107 = vsel %vm106, %v99, %v103
    %v108 = vsel %vm106, %v101, %v105
    %v109 = vsel %vm106, %v103, %v99
    %v110 = vsel %vm106, %v105, %v101
    %v111 = vsel %vm53, 1, 0
    %v112 = vsel %vm54, 1, 0
    %vm113 = vcmp.eq.s32.totalorder %v111, 1
    %vm114 = vcmp.eq.s32.totalorder %v112, 1
    %v115 = vsel %vm113, %v109, 0.0
    %v116 = vsel %vm114, %v107, 0.0
    %v117 = vsel %vm113, %v110, 0.0
    %v118 = vsel %vm114, %v108, 0.0
    %119 = vst [vmem:[#allocation2 + $0x40] sm:$0xff] %v115
    %120 = vst [vmem:[#allocation2 + $0x48] sm:$0xff] %v116
    %121 = vst [vmem:[#allocation2 + $0x60] sm:$0xff] %v117
    %122 = vst [vmem:[#allocation2 + $0x68] sm:$0xff] %v118
    %123 = vrot.lane.b32.xlu0 %v69, 15
    %v124 = vpop.permute.xlu0 %123
    %125 = vrot.lane.b32.xlu0 %v71, 15
    %v126 = vpop.permute.xlu0 %125
    %127 = vrot.lane.b32.xlu0 %v70, 15
    %v128 = vpop.permute.xlu0 %127
    %129 = vrot.lane.b32.xlu0 %v72, 15
    %v130 = vpop.permute.xlu0 %129
    %vm131 = vcmp.lt.s32.totalorder %v47, 15
    %v132 = vsel %vm131, %v124, %v128
    %v133 = vsel %vm131, %v126, %v130
    %v134 = vsel %vm131, %v128, %v124
    %v135 = vsel %vm131, %v130, %v126
    %v136 = vsel %vm63, 1, 0
    %v137 = vsel %vm64, 1, 0
    %vm138 = vcmp.eq.s32.totalorder %v136, 1
    %vm139 = vcmp.eq.s32.totalorder %v137, 1
    %v140 = vsel %vm138, %v134, 0.0
    %v141 = vsel %vm139, %v132, 0.0
    %v142 = vsel %vm138, %v135, 0.0
    %v143 = vsel %vm139, %v133, 0.0
    %144 = vst [vmem:[#allocation2 + $0x80] sm:$0xff] %v140
    %145 = vst [vmem:[#allocation2 + $0x88] sm:$0xff] %v141
    %146 = vst [vmem:[#allocation2 + $0xa0] sm:$0xff] %v142
    %147 = vst [vmem:[#allocation2 + $0xa8] sm:$0xff] %v143
    %148 = vrot.lane.b32.xlu0 %v69, 1
    %v149 = vpop.permute.xlu0 %148
    %150 = vrot.lane.b32.xlu0 %v71, 1
    %v151 = vpop.permute.xlu0 %150
    %152 = vrot.lane.b32.xlu0 %v70, 1
    %v153 = vpop.permute.xlu0 %152
    %154 = vrot.lane.b32.xlu0 %v72, 1
    %v155 = vpop.permute.xlu0 %154
    %vm156 = vcmp.lt.s32.totalorder %v47, 1
    %v157 = vsel %vm156, %v149, %v153
    %v158 = vsel %vm156, %v151, %v155
    %v159 = vsel %vm156, %v153, %v149
    %v160 = vsel %vm156, %v155, %v151
    %v161 = vsel %vm57, 1, 0
    %v162 = vsel %vm58, 1, 0
    %vm163 = vcmp.eq.s32.totalorder %v161, 1
    %vm164 = vcmp.eq.s32.totalorder %v162, 1
    %v165 = vsel %vm163, %v159, 0.0
    %v166 = vsel %vm164, %v157, 0.0
    %v167 = vsel %vm163, %v160, 0.0
    %v168 = vsel %vm164, %v158, 0.0
    %169 = vst [vmem:[#allocation2 + $0xc0] sm:$0xff] %v165
    %170 = vst [vmem:[#allocation2 + $0xc8] sm:$0xff] %v166
    %171 = vst [vmem:[#allocation2 + $0xe0] sm:$0xff] %v167
    %172 = vst [vmem:[#allocation2 + $0xe8] sm:$0xff] %v168
    %173 = vst [vmem:[#allocation2 + $0x100] sm:$0xff] %v69
    %174 = vst [vmem:[#allocation2 + $0x108] sm:$0xff] %v70
    %175 = vst [vmem:[#allocation2 + $0x120] sm:$0xff] %v71
    %176 = vst [vmem:[#allocation2 + $0x128] sm:$0xff] %v72
    %177 = vrot.lane.b32.xlu0 %v69, 127
    %v178 = vpop.permute.xlu0 %177
    %179 = vrot.lane.b32.xlu0 %v71, 127
    %v180 = vpop.permute.xlu0 %179
    %181 = vrot.lane.b32.xlu0 %v70, 127
    %v182 = vpop.permute.xlu0 %181
    %183 = vrot.lane.b32.xlu0 %v72, 127
    %v184 = vpop.permute.xlu0 %183
    %vm185 = vcmp.lt.s32.totalorder %v47, 127
    %v186 = vsel %vm185, %v178, %v182
    %v187 = vsel %vm185, %v180, %v184
    %v188 = vsel %vm185, %v182, %v178
    %v189 = vsel %vm185, %v184, %v180
    %v190 = vsel %vm59, 1, 0
    %v191 = vsel %vm60, 1, 0
    %vm192 = vcmp.eq.s32.totalorder %v190, 1
    %vm193 = vcmp.eq.s32.totalorder %v191, 1
    %v194 = vsel %vm192, %v186, 0.0
    %v195 = vsel %vm193, %v188, 0.0
    %v196 = vsel %vm192, %v187, 0.0
    %v197 = vsel %vm193, %v189, 0.0
    %198 = vst [vmem:[#allocation2 + $0x140] sm:$0xff] %v194
    %199 = vst [vmem:[#allocation2 + $0x148] sm:$0xff] %v195
    %200 = vst [vmem:[#allocation2 + $0x160] sm:$0xff] %v196
    %201 = vst [vmem:[#allocation2 + $0x168] sm:$0xff] %v197
    %202 = vrot.lane.b32.xlu0 %v69, 113
    %v203 = vpop.permute.xlu0 %202
    %204 = vrot.lane.b32.xlu0 %v71, 113
    %v205 = vpop.permute.xlu0 %204
    %206 = vrot.lane.b32.xlu0 %v70, 113
    %v207 = vpop.permute.xlu0 %206
    %208 = vrot.lane.b32.xlu0 %v72, 113
    %v209 = vpop.permute.xlu0 %208
    %vm210 = vcmp.lt.s32.totalorder %v47, 113
    %v211 = vsel %vm210, %v203, %v207
    %v212 = vsel %vm210, %v205, %v209
    %v213 = vsel %vm210, %v207, %v203
    %v214 = vsel %vm210, %v209, %v205
    %v215 = vsel %vm65, 1, 0
    %v216 = vsel %vm66, 1, 0
    %vm217 = vcmp.eq.s32.totalorder %v215, 1
    %vm218 = vcmp.eq.s32.totalorder %v216, 1
    %v219 = vsel %vm217, %v211, 0.0
    %v220 = vsel %vm218, %v213, 0.0
    %v221 = vsel %vm217, %v212, 0.0
    %v222 = vsel %vm218, %v214, 0.0
    %223 = vst [vmem:[#allocation2 + $0x180] sm:$0xff] %v219
    %224 = vst [vmem:[#allocation2 + $0x188] sm:$0xff] %v220
    %225 = vst [vmem:[#allocation2 + $0x1a0] sm:$0xff] %v221
    %226 = vst [vmem:[#allocation2 + $0x1a8] sm:$0xff] %v222
    %227 = vrot.lane.b32.xlu0 %v69, 112
    %v228 = vpop.permute.xlu0 %227
    %229 = vrot.lane.b32.xlu0 %v71, 112
    %v230 = vpop.permute.xlu0 %229
    %231 = vrot.lane.b32.xlu0 %v70, 112
    %v232 = vpop.permute.xlu0 %231
    %233 = vrot.lane.b32.xlu0 %v72, 112
    %v234 = vpop.permute.xlu0 %233
    %vm235 = vcmp.lt.s32.totalorder %v47, 112
    %v236 = vsel %vm235, %v228, %v232
    %v237 = vsel %vm235, %v230, %v234
    %v238 = vsel %vm235, %v232, %v228
    %v239 = vsel %vm235, %v234, %v230
    %v240 = vsel %vm55, 1, 0
    %v241 = vsel %vm56, 1, 0
    %vm242 = vcmp.eq.s32.totalorder %v240, 1
    %vm243 = vcmp.eq.s32.totalorder %v241, 1
    %v244 = vsel %vm242, %v236, 0.0
    %v245 = vsel %vm243, %v238, 0.0
    %v246 = vsel %vm242, %v237, 0.0
    %v247 = vsel %vm243, %v239, 0.0
    %248 = vst [vmem:[#allocation2 + $0x1c0] sm:$0xff] %v244
    %249 = vst [vmem:[#allocation2 + $0x1c8] sm:$0xff] %v245
    %250 = vst [vmem:[#allocation2 + $0x1e0] sm:$0xff] %v246
    %251 = vst [vmem:[#allocation2 + $0x1e8] sm:$0xff] %v247
    %252 = vrot.lane.b32.xlu0 %v69, 111
    %v253 = vpop.permute.xlu0 %252
    %254 = vrot.lane.b32.xlu0 %v71, 111
    %v255 = vpop.permute.xlu0 %254
    %256 = vrot.lane.b32.xlu0 %v70, 111
    %v257 = vpop.permute.xlu0 %256
    %258 = vrot.lane.b32.xlu0 %v72, 111
    %v259 = vpop.permute.xlu0 %258
    %vm260 = vcmp.lt.s32.totalorder %v47, 111
    %v261 = vsel %vm260, %v253, %v257
    %v262 = vsel %vm260, %v255, %v259
    %v263 = vsel %vm260, %v257, %v253
    %v264 = vsel %vm260, %v259, %v255
    %v265 = vsel %vm67, 1, 0
    %v266 = vsel %vm68, 1, 0
    %vm267 = vcmp.eq.s32.totalorder %v265, 1
    %vm268 = vcmp.eq.s32.totalorder %v266, 1
    %v269 = vsel %vm267, %v261, 0.0
    %v270 = vsel %vm268, %v263, 0.0
    %v271 = vsel %vm267, %v262, 0.0
    %v272 = vsel %vm268, %v264, 0.0
    %273 = vst [vmem:[#allocation2 + $0x200] sm:$0xff] %v269
    %274 = vst [vmem:[#allocation2 + $0x208] sm:$0xff] %v270
    %275 = vst [vmem:[#allocation2 + $0x220] sm:$0xff] %v271
    %276 = vst [vmem:[#allocation2 + $0x228] sm:$0xff] %v272
    %s277 = scalar_lea.vmem [#allocation4], 32
    %v278 = vld [vmem:[%s277] sm:$0xff]
    %v279 = vld [vmem:[%s277 + $0x8] sm:$0xff]
    %v280 = vld [vmem:[%s277 + $0x10] sm:$0xff]
    %v281 = vld [vmem:[%s277 + $0x18] sm:$0xff]
    %282 = vrot.lane.b32.xlu0 %v278, 17
    %v283 = vpop.permute.xlu0 %282
    %284 = vrot.lane.b32.xlu0 %v280, 17
    %v285 = vpop.permute.xlu0 %284
    %286 = vrot.lane.b32.xlu0 %v279, 17
    %v287 = vpop.permute.xlu0 %286
    %288 = vrot.lane.b32.xlu0 %v281, 17
    %v289 = vpop.permute.xlu0 %288
    %v290 = vsel %vm81, %v283, %v287
    %v291 = vsel %vm81, %v285, %v289
    %v292 = vsel %vm81, %v287, %v283
    %v293 = vsel %vm81, %v289, %v285
    %v294 = vsel %vm88, %v292, 0.0
    %v295 = vsel %vm89, %v290, 0.0
    %v296 = vsel %vm88, %v293, 0.0
    %v297 = vsel %vm89, %v291, 0.0
    %298 = vst [vmem:[#allocation2 + $0x10] sm:$0xff] %v294
    %299 = vst [vmem:[#allocation2 + $0x18] sm:$0xff] %v295
    %300 = vst [vmem:[#allocation2 + $0x30] sm:$0xff] %v296
    %301 = vst [vmem:[#allocation2 + $0x38] sm:$0xff] %v297
    %302 = vrot.lane.b32.xlu0 %v278, 16
    %v303 = vpop.permute.xlu0 %302
    %304 = vrot.lane.b32.xlu0 %v280, 16
    %v305 = vpop.permute.xlu0 %304
    %306 = vrot.lane.b32.xlu0 %v279, 16
    %v307 = vpop.permute.xlu0 %306
    %308 = vrot.lane.b32.xlu0 %v281, 16
    %v309 = vpop.permute.xlu0 %308
    %v310 = vsel %vm106, %v303, %v307
    %v311 = vsel %vm106, %v305, %v309
    %v312 = vsel %vm106, %v307, %v303
    %v313 = vsel %vm106, %v309, %v305
    %v314 = vsel %vm113, %v312, 0.0
    %v315 = vsel %vm114, %v310, 0.0
    %v316 = vsel %vm113, %v313, 0.0
    %v317 = vsel %vm114, %v311, 0.0
    %318 = vst [vmem:[#allocation2 + $0x50] sm:$0xff] %v314
    %319 = vst [vmem:[#allocation2 + $0x58] sm:$0xff] %v315
    %320 = vst [vmem:[#allocation2 + $0x70] sm:$0xff] %v316
    %321 = vst [vmem:[#allocation2 + $0x78] sm:$0xff] %v317
    %322 = vrot.lane.b32.xlu0 %v278, 15
    %v323 = vpop.permute.xlu0 %322
    %324 = vrot.lane.b32.xlu0 %v280, 15
    %v325 = vpop.permute.xlu0 %324
    %326 = vrot.lane.b32.xlu0 %v279, 15
    %v327 = vpop.permute.xlu0 %326
    %328 = vrot.lane.b32.xlu0 %v281, 15
    %v329 = vpop.permute.xlu0 %328
    %v330 = vsel %vm131, %v323, %v327
    %v331 = vsel %vm131, %v325, %v329
    %v332 = vsel %vm131, %v327, %v323
    %v333 = vsel %vm131, %v329, %v325
    %v334 = vsel %vm138, %v332, 0.0
    %v335 = vsel %vm139, %v330, 0.0
    %v336 = vsel %vm138, %v333, 0.0
    %v337 = vsel %vm139, %v331, 0.0
    %338 = vst [vmem:[#allocation2 + $0x90] sm:$0xff] %v334
    %339 = vst [vmem:[#allocation2 + $0x98] sm:$0xff] %v335
    %340 = vst [vmem:[#allocation2 + $0xb0] sm:$0xff] %v336
    %341 = vst [vmem:[#allocation2 + $0xb8] sm:$0xff] %v337
    %342 = vrot.lane.b32.xlu0 %v278, 1
    %v343 = vpop.permute.xlu0 %342
    %344 = vrot.lane.b32.xlu0 %v280, 1
    %v345 = vpop.permute.xlu0 %344
    %346 = vrot.lane.b32.xlu0 %v279, 1
    %v347 = vpop.permute.xlu0 %346
    %348 = vrot.lane.b32.xlu0 %v281, 1
    %v349 = vpop.permute.xlu0 %348
    %v350 = vsel %vm156, %v343, %v347
    %v351 = vsel %vm156, %v345, %v349
    %v352 = vsel %vm156, %v347, %v343
    %v353 = vsel %vm156, %v349, %v345
    %v354 = vsel %vm163, %v352, 0.0
    %v355 = vsel %vm164, %v350, 0.0
    %v356 = vsel %vm163, %v353, 0.0
    %v357 = vsel %vm164, %v351, 0.0
    %358 = vst [vmem:[#allocation2 + $0xd0] sm:$0xff] %v354
    %359 = vst [vmem:[#allocation2 + $0xd8] sm:$0xff] %v355
    %360 = vst [vmem:[#allocation2 + $0xf0] sm:$0xff] %v356
    %361 = vst [vmem:[#allocation2 + $0xf8] sm:$0xff] %v357
    %362 = vst [vmem:[#allocation2 + $0x110] sm:$0xff] %v278
    %363 = vst [vmem:[#allocation2 + $0x118] sm:$0xff] %v279
    %364 = vst [vmem:[#allocation2 + $0x130] sm:$0xff] %v280
    %365 = vst [vmem:[#allocation2 + $0x138] sm:$0xff] %v281
    %366 = vrot.lane.b32.xlu0 %v278, 127
    %v367 = vpop.permute.xlu0 %366
    %368 = vrot.lane.b32.xlu0 %v280, 127
    %v369 = vpop.permute.xlu0 %368
    %370 = vrot.lane.b32.xlu0 %v279, 127
    %v371 = vpop.permute.xlu0 %370
    %372 = vrot.lane.b32.xlu0 %v281, 127
    %v373 = vpop.permute.xlu0 %372
    %v374 = vsel %vm185, %v367, %v371
    %v375 = vsel %vm185, %v369, %v373
    %v376 = vsel %vm185, %v371, %v367
    %v377 = vsel %vm185, %v373, %v369
    %v378 = vsel %vm192, %v374, 0.0
    %v379 = vsel %vm193, %v376, 0.0
    %v380 = vsel %vm192, %v375, 0.0
    %v381 = vsel %vm193, %v377, 0.0
    %382 = vst [vmem:[#allocation2 + $0x150] sm:$0xff] %v378
    %383 = vst [vmem:[#allocation2 + $0x158] sm:$0xff] %v379
    %384 = vst [vmem:[#allocation2 + $0x170] sm:$0xff] %v380
    %385 = vst [vmem:[#allocation2 + $0x178] sm:$0xff] %v381
    %386 = vrot.lane.b32.xlu0 %v278, 113
    %v387 = vpop.permute.xlu0 %386
    %388 = vrot.lane.b32.xlu0 %v280, 113
    %v389 = vpop.permute.xlu0 %388
    %390 = vrot.lane.b32.xlu0 %v279, 113
    %v391 = vpop.permute.xlu0 %390
    %392 = vrot.lane.b32.xlu0 %v281, 113
    %v393 = vpop.permute.xlu0 %392
    %v394 = vsel %vm210, %v387, %v391
    %v395 = vsel %vm210, %v389, %v393
    %v396 = vsel %vm210, %v391, %v387
    %v397 = vsel %vm210, %v393, %v389
    %v398 = vsel %vm217, %v394, 0.0
    %v399 = vsel %vm218, %v396, 0.0
    %v400 = vsel %vm217, %v395, 0.0
    %v401 = vsel %vm218, %v397, 0.0
    %402 = vst [vmem:[#allocation2 + $0x190] sm:$0xff] %v398
    %403 = vst [vmem:[#allocation2 + $0x198] sm:$0xff] %v399
    %404 = vst [vmem:[#allocation2 + $0x1b0] sm:$0xff] %v400
    %405 = vst [vmem:[#allocation2 + $0x1b8] sm:$0xff] %v401
    %406 = vrot.lane.b32.xlu0 %v278, 112
    %v407 = vpop.permute.xlu0 %406
    %408 = vrot.lane.b32.xlu0 %v280, 112
    %v409 = vpop.permute.xlu0 %408
    %410 = vrot.lane.b32.xlu0 %v279, 112
    %v411 = vpop.permute.xlu0 %410
    %412 = vrot.lane.b32.xlu0 %v281, 112
    %v413 = vpop.permute.xlu0 %412
    %v414 = vsel %vm235, %v407, %v411
    %v415 = vsel %vm235, %v409, %v413
    %v416 = vsel %vm235, %v411, %v407
    %v417 = vsel %vm235, %v413, %v409
    %v418 = vsel %vm242, %v414, 0.0
    %v419 = vsel %vm243, %v416, 0.0
    %v420 = vsel %vm242, %v415, 0.0
    %v421 = vsel %vm243, %v417, 0.0
    %422 = vst [vmem:[#allocation2 + $0x1d0] sm:$0xff] %v418
    %423 = vst [vmem:[#allocation2 + $0x1d8] sm:$0xff] %v419
    %424 = vst [vmem:[#allocation2 + $0x1f0] sm:$0xff] %v420
    %425 = vst [vmem:[#allocation2 + $0x1f8] sm:$0xff] %v421
    %426 = vrot.lane.b32.xlu0 %v278, 111
    %v427 = vpop.permute.xlu0 %426
    %428 = vrot.lane.b32.xlu0 %v280, 111
    %v429 = vpop.permute.xlu0 %428
    %430 = vrot.lane.b32.xlu0 %v279, 111
    %v431 = vpop.permute.xlu0 %430
    %432 = vrot.lane.b32.xlu0 %v281, 111
    %v433 = vpop.permute.xlu0 %432
    %v434 = vsel %vm260, %v427, %v431
    %v435 = vsel %vm260, %v429, %v433
    %v436 = vsel %vm260, %v431, %v427
    %v437 = vsel %vm260, %v433, %v429
    %v438 = vsel %vm267, %v434, 0.0
    %v439 = vsel %vm268, %v436, 0.0
    %v440 = vsel %vm267, %v435, 0.0
    %v441 = vsel %vm268, %v437, 0.0
    %442 = vst [vmem:[#allocation2 + $0x210] sm:$0xff] %v438
    %443 = vst [vmem:[#allocation2 + $0x218] sm:$0xff] %v439
    %444 = vst [vmem:[#allocation2 + $0x230] sm:$0xff] %v440
    %445 = vst [vmem:[#allocation2 + $0x238] sm:$0xff] %v441
    %v446 = vld [vmem:[#allocation7] sm:$0xff]
    %v447 = vld [vmem:[#allocation7 + $0x8] sm:$0xff]
    %v448 = vld [vmem:[#allocation2] sm:$0xff]
    %v449 = vld [vmem:[#allocation2 + $0x8] sm:$0xff]
    %v450 = vld [vmem:[#allocation2 + $0x10] sm:$0xff]
    %v451 = vld [vmem:[#allocation2 + $0x18] sm:$0xff]
    %v452 = vld [vmem:[#allocation2 + $0x20] sm:$0xff]
    %v453 = vld [vmem:[#allocation2 + $0x28] sm:$0xff]
    %v454 = vld [vmem:[#allocation2 + $0x30] sm:$0xff]
    %v455 = vld [vmem:[#allocation2 + $0x38] sm:$0xff]
    %v456 = vld [vmem:[#allocation2 + $0x40] sm:$0xff]
    %v457 = vld [vmem:[#allocation2 + $0x48] sm:$0xff]
    %v458 = vld [vmem:[#allocation2 + $0x50] sm:$0xff]
    %v459 = vld [vmem:[#allocation2 + $0x58] sm:$0xff]
    %v460 = vld [vmem:[#allocation2 + $0x60] sm:$0xff]
    %v461 = vld [vmem:[#allocation2 + $0x68] sm:$0xff]
    %v462 = vld [vmem:[#allocation2 + $0x70] sm:$0xff]
    %v463 = vld [vmem:[#allocation2 + $0x78] sm:$0xff]
    %v464 = vld [vmem:[#allocation2 + $0x80] sm:$0xff]
    %v465 = vld [vmem:[#allocation2 + $0x88] sm:$0xff]
    %v466 = vld [vmem:[#allocation2 + $0x90] sm:$0xff]
    %v467 = vld [vmem:[#allocation2 + $0x98] sm:$0xff]
    %v468 = vld [vmem:[#allocation2 + $0xa0] sm:$0xff]
    %v469 = vld [vmem:[#allocation2 + $0xa8] sm:$0xff]
    %v470 = vld [vmem:[#allocation2 + $0xb0] sm:$0xff]
    %v471 = vld [vmem:[#allocation2 + $0xb8] sm:$0xff]
    %v472 = vld [vmem:[#allocation2 + $0xc0] sm:$0xff]
    %v473 = vld [vmem:[#allocation2 + $0xc8] sm:$0xff]
    %v474 = vld [vmem:[#allocation2 + $0xd0] sm:$0xff]
    %v475 = vld [vmem:[#allocation2 + $0xd8] sm:$0xff]
    %v476 = vld [vmem:[#allocation2 + $0xe0] sm:$0xff]
    %v477 = vld [vmem:[#allocation2 + $0xe8] sm:$0xff]
    %v478 = vld [vmem:[#allocation2 + $0xf0] sm:$0xff]
    %v479 = vld [vmem:[#allocation2 + $0xf8] sm:$0xff]
    %v480 = vld [vmem:[#allocation2 + $0x100] sm:$0xff]
    %v481 = vld [vmem:[#allocation2 + $0x108] sm:$0xff]
    %v482 = vld [vmem:[#allocation2 + $0x110] sm:$0xff]
    %v483 = vld [vmem:[#allocation2 + $0x118] sm:$0xff]
    %v484 = vld [vmem:[#allocation2 + $0x120] sm:$0xff]
    %v485 = vld [vmem:[#allocation2 + $0x128] sm:$0xff]
    %v486 = vld [vmem:[#allocation2 + $0x130] sm:$0xff]
    %v487 = vld [vmem:[#allocation2 + $0x138] sm:$0xff]
    %v488 = vld [vmem:[#allocation2 + $0x140] sm:$0xff]
    %v489 = vld [vmem:[#allocation2 + $0x148] sm:$0xff]
    %v490 = vld [vmem:[#allocation2 + $0x150] sm:$0xff]
    %v491 = vld [vmem:[#allocation2 + $0x158] sm:$0xff]
    %v492 = vld [vmem:[#allocation2 + $0x160] sm:$0xff]
    %v493 = vld [vmem:[#allocation2 + $0x168] sm:$0xff]
    %v494 = vld [vmem:[#allocation2 + $0x170] sm:$0xff]
    %v495 = vld [vmem:[#allocation2 + $0x178] sm:$0xff]
    %v496 = vld [vmem:[#allocation2 + $0x180] sm:$0xff]
    %v497 = vld [vmem:[#allocation2 + $0x188] sm:$0xff]
    %v498 = vld [vmem:[#allocation2 + $0x190] sm:$0xff]
    %v499 = vld [vmem:[#allocation2 + $0x198] sm:$0xff]
    %v500 = vld [vmem:[#allocation2 + $0x1a0] sm:$0xff]
    %v501 = vld [vmem:[#allocation2 + $0x1a8] sm:$0xff]
    %v502 = vld [vmem:[#allocation2 + $0x1b0] sm:$0xff]
    %v503 = vld [vmem:[#allocation2 + $0x1b8] sm:$0xff]
    %v504 = vld [vmem:[#allocation2 + $0x1c0] sm:$0xff]
    %v505 = vld [vmem:[#allocation2 + $0x1c8] sm:$0xff]
    %v506 = vld [vmem:[#allocation2 + $0x1d0] sm:$0xff]
    %v507 = vld [vmem:[#allocation2 + $0x1d8] sm:$0xff]
    %v508 = vld [vmem:[#allocation2 + $0x1e0] sm:$0xff]
    %v509 = vld [vmem:[#allocation2 + $0x1e8] sm:$0xff]
    %v510 = vld [vmem:[#allocation2 + $0x1f0] sm:$0xff]
    %v511 = vld [vmem:[#allocation2 + $0x1f8] sm:$0xff]
    %v512 = vld [vmem:[#allocation2 + $0x200] sm:$0xff]
    %v513 = vld [vmem:[#allocation2 + $0x208] sm:$0xff]
    %v514 = vld [vmem:[#allocation2 + $0x210] sm:$0xff]
    %v515 = vld [vmem:[#allocation2 + $0x218] sm:$0xff]
    %v516 = vld [vmem:[#allocation2 + $0x220] sm:$0xff]
    %v517 = vld [vmem:[#allocation2 + $0x228] sm:$0xff]
    %v518 = vld [vmem:[#allocation2 + $0x230] sm:$0xff]
    %v519 = vld [vmem:[#allocation2 + $0x238] sm:$0xff]
    %vm520 = vcmask 130048
    %v522 = vsel %vm520, %v447, 0
    %524 = vmatpush.msra.mxu0 %v508
    %525 = vmatpush.msra.mxu0 %v504
    %526 = vmatpush.msra.mxu0 %v500
    %527 = vmatpush.msra.mxu0 %v496
    %528 = vmatpush.msra.mxu0 %v492
    %529 = vmatpush.msra.mxu0 %v488
    %530 = vmatpush.msra.mxu0 %v484
    %531 = vmatpush.msra.mxu0 %v480
    %532 = vmatpush.msra.mxu0 %v476
    %533 = vmatpush.msra.mxu0 %v472
    %534 = vmatpush.msra.mxu0 %v468
    %535 = vmatpush.msra.mxu0 %v464
    %536 = vmatpush.msra.mxu0 %v460
    %537 = vmatpush.msra.mxu0 %v456
    %538 = vmatpush.msra.mxu0 %v452
    %539 = vmatpush.msra.mxu0 %v448
    %540 = vmatmul.f32.gmra.mxu0 %v446
    %v541 = vpop.f32.mrf.mxu0
    %v542 = vadd.f32 0.0, %v541
    %543 = vdwg.mxu0
    %544 = vmatpush.msra.mxu0 0.0
    %545 = vmatpush.msra.mxu0 0.0
    %546 = vmatpush.msra.mxu0 0.0
    %547 = vmatpush.msra.mxu0 0.0
    %548 = vmatpush.msra.mxu0 0.0
    %549 = vmatpush.msra.mxu0 0.0
    %550 = vmatpush.msra.mxu0 0.0
    %551 = vmatpush.msra.mxu0 0.0
    %552 = vmatpush.msra.mxu0 0.0
    %553 = vmatpush.msra.mxu0 0.0
    %554 = vmatpush.msra.mxu0 0.0
    %555 = vmatpush.msra.mxu0 0.0
    %556 = vmatpush.msra.mxu0 0.0
    %557 = vmatpush.msra.mxu0 0.0
    %558 = vmatpush.msra.mxu0 %v516
    %559 = vmatpush.msra.mxu0 %v512
    %560 = vmatmul.f32.gmra.mxu0 %v522
    %v561 = vpop.f32.mrf.mxu0
    %v562 = vadd.f32 %v542, %v561
    %563 = vdwg.mxu0
    %564 = vmatpush.msra.mxu0 %v509
    %565 = vmatpush.msra.mxu0 %v505
    %566 = vmatpush.msra.mxu0 %v501
    %567 = vmatpush.msra.mxu0 %v497
    %568 = vmatpush.msra.mxu0 %v493
    %569 = vmatpush.msra.mxu0 %v489
    %570 = vmatpush.msra.mxu0 %v485
    %571 = vmatpush.msra.mxu0 %v481
    %572 = vmatpush.msra.mxu0 %v477
    %573 = vmatpush.msra.mxu0 %v473
    %574 = vmatpush.msra.mxu0 %v469
    %575 = vmatpush.msra.mxu0 %v465
    %576 = vmatpush.msra.mxu0 %v461
    %577 = vmatpush.msra.mxu0 %v457
    %578 = vmatpush.msra.mxu0 %v453
    %579 = vmatpush.msra.mxu0 %v449
    %580 = vmatmul.f32.gmra.mxu0 %v446
    %v581 = vpop.f32.mrf.mxu0
    %v582 = vadd.f32 0.0, %v581
    %583 = vdwg.mxu0
    %584 = vmatpush.msra.mxu0 0.0
    %585 = vmatpush.msra.mxu0 0.0
    %586 = vmatpush.msra.mxu0 0.0
    %587 = vmatpush.msra.mxu0 0.0
    %588 = vmatpush.msra.mxu0 0.0
    %589 = vmatpush.msra.mxu0 0.0
    %590 = vmatpush.msra.mxu0 0.0
    %591 = vmatpush.msra.mxu0 0.0
    %592 = vmatpush.msra.mxu0 0.0
    %593 = vmatpush.msra.mxu0 0.0
    %594 = vmatpush.msra.mxu0 0.0
    %595 = vmatpush.msra.mxu0 0.0
    %596 = vmatpush.msra.mxu0 0.0
    %597 = vmatpush.msra.mxu0 0.0
    %598 = vmatpush.msra.mxu0 %v517
    %599 = vmatpush.msra.mxu0 %v513
    %600 = vmatmul.f32.gmra.mxu0 %v522
    %v601 = vpop.f32.mrf.mxu0
    %v602 = vadd.f32 %v582, %v601
    %603 = vdwg.mxu0
    %604 = vmatpush.msra.mxu0 %v510
    %605 = vmatpush.msra.mxu0 %v506
    %606 = vmatpush.msra.mxu0 %v502
    %607 = vmatpush.msra.mxu0 %v498
    %608 = vmatpush.msra.mxu0 %v494
    %609 = vmatpush.msra.mxu0 %v490
    %610 = vmatpush.msra.mxu0 %v486
    %611 = vmatpush.msra.mxu0 %v482
    %612 = vmatpush.msra.mxu0 %v478
    %613 = vmatpush.msra.mxu0 %v474
    %614 = vmatpush.msra.mxu0 %v470
    %615 = vmatpush.msra.mxu0 %v466
    %616 = vmatpush.msra.mxu0 %v462
    %617 = vmatpush.msra.mxu0 %v458
    %618 = vmatpush.msra.mxu0 %v454
    %619 = vmatpush.msra.mxu0 %v450
    %620 = vmatmul.f32.gmra.mxu0 %v446
    %v621 = vpop.f32.mrf.mxu0
    %v622 = vadd.f32 0.0, %v621
    %623 = vdwg.mxu0
    %624 = vmatpush.msra.mxu0 0.0
    %625 = vmatpush.msra.mxu0 0.0
    %626 = vmatpush.msra.mxu0 0.0
    %627 = vmatpush.msra.mxu0 0.0
    %628 = vmatpush.msra.mxu0 0.0
    %629 = vmatpush.msra.mxu0 0.0
    %630 = vmatpush.msra.mxu0 0.0
    %631 = vmatpush.msra.mxu0 0.0
    %632 = vmatpush.msra.mxu0 0.0
    %633 = vmatpush.msra.mxu0 0.0
    %634 = vmatpush.msra.mxu0 0.0
    %635 = vmatpush.msra.mxu0 0.0
    %636 = vmatpush.msra.mxu0 0.0
    %637 = vmatpush.msra.mxu0 0.0
    %638 = vmatpush.msra.mxu0 %v518
    %639 = vmatpush.msra.mxu0 %v514
    %640 = vmatmul.f32.gmra.mxu0 %v522
    %v641 = vpop.f32.mrf.mxu0
    %v642 = vadd.f32 %v622, %v641
    %643 = vdwg.mxu0
    %644 = vmatpush.msra.mxu0 %v511
    %645 = vmatpush.msra.mxu0 %v507
    %646 = vmatpush.msra.mxu0 %v503
    %647 = vmatpush.msra.mxu0 %v499
    %648 = vmatpush.msra.mxu0 %v495
    %649 = vmatpush.msra.mxu0 %v491
    %650 = vmatpush.msra.mxu0 %v487
    %651 = vmatpush.msra.mxu0 %v483
    %652 = vmatpush.msra.mxu0 %v479
    %653 = vmatpush.msra.mxu0 %v475
    %654 = vmatpush.msra.mxu0 %v471
    %655 = vmatpush.msra.mxu0 %v467
    %656 = vmatpush.msra.mxu0 %v463
    %657 = vmatpush.msra.mxu0 %v459
    %658 = vmatpush.msra.mxu0 %v455
    %659 = vmatpush.msra.mxu0 %v451
    %660 = vmatmul.f32.gmra.mxu0 %v446
    %v661 = vpop.f32.mrf.mxu0
    %v662 = vadd.f32 0.0, %v661
    %663 = vdwg.mxu0
    %664 = vmatpush.msra.mxu0 0.0
    %665 = vmatpush.msra.mxu0 0.0
    %666 = vmatpush.msra.mxu0 0.0
    %667 = vmatpush.msra.mxu0 0.0
    %668 = vmatpush.msra.mxu0 0.0
    %669 = vmatpush.msra.mxu0 0.0
    %670 = vmatpush.msra.mxu0 0.0
    %671 = vmatpush.msra.mxu0 0.0
    %672 = vmatpush.msra.mxu0 0.0
    %673 = vmatpush.msra.mxu0 0.0
    %674 = vmatpush.msra.mxu0 0.0
    %675 = vmatpush.msra.mxu0 0.0
    %676 = vmatpush.msra.mxu0 0.0
    %677 = vmatpush.msra.mxu0 0.0
    %678 = vmatpush.msra.mxu0 %v519
    %679 = vmatpush.msra.mxu0 %v515
    %680 = vmatmul.f32.gmra.mxu0 %v522
    %v681 = vpop.f32.mrf.mxu0
    %v682 = vadd.f32 %v662, %v681
    %683 = vdwg.mxu0
    %s684 = sld [smem:[#allocation3]]
    %v685 = vstv %s684
    %v686 = vadd.f32 %v562, %v685
    %v687 = vadd.f32 %v602, %v685
    %v688 = vadd.f32 %v642, %v685
    %v689 = vadd.f32 %v682, %v685
    %v690 = vtanh.pop %v686
    %v691 = vtanh.pop %v687
    %v692 = vtanh.pop %v688
    %v693 = vtanh.pop %v689
    %v698 = vrot.slane %v691, 7
    %v699 = vrot.slane %v692, 6
    %v700 = vrot.slane %v693, 5
    %vm701 = vcmask 1040384
    %v702 = vsel %vm701, %v690, %v698
    %vm703 = vcmask 1042434
    %v704 = vsel %vm703, %v699, %v700
    %vm705 = vcmask 1041408
    %v706 = vsel %vm705, %v702, %v704
    %v708 = vlaneseq
    %vm709 = vcmp.ge.s32.totalorder %v708, 0
    %vm710 = vcmp.lt.s32.totalorder %v708, 512
    %vm711 = vmand %vm709, %vm710
    %712 = vst.msk [vmem:[#allocation9] sm:$0xf] %vm711, %v706
    // Predicated region
    $region22: #{tpu_custom_call.1} parent=1 // pred_check
      _
    $region23: #{tpu_custom_call.1} parent=1 // pred_check_branch
      %714 = sbr.rel (0) target = $region25
    $region24: #{tpu_custom_call.1} parent=1 // pred_region
      %716 = vsyncadd [#allocation6], 0
      %s718 = sshll.u32 [#allocation9], 4
      %s719 = int_to_ptr.vmem [resolvable:$true] %s718
      %s720 = sshll.u32 %s3, 4
      %s721 = int_to_ptr.hbm [resolvable:$true] %s720
      %723 = dma.vmem_to_hbm [thread:$0]  %s719, 64, %s721, [#allocation6]
    $region25: #{tpu_custom_call.1} parent=1 // pred_fallthru
      _
    // Predicated region
    $region26: #{tpu_custom_call.1} parent=1 // pred_check
      _
    $region27: #{tpu_custom_call.1} parent=1 // pred_check_branch
      %725 = sbr.rel (0) target = $region29
    $region28: #{tpu_custom_call.1} parent=1 // pred_region
      %727 = dma.done [#allocation6], 64
    $region29: #{tpu_custom_call.1} parent=1 // pred_fallthru
      _
    %728 = vsyncpa [#allocation5], 1
    %729 = vsyncpa [#allocation8], 1
    %730 = vsyncpa [#allocation6], 1

</llo_original>
